<compile_context>
chip_gen: v5e
topology: v5e:2x2
jax: 0.10.0
libtpu: 0.0.40
codegen_flags: <defaults>
</compile_context>

<pallas_src>
import functools

import jax
import jax.numpy as jnp
from jax import lax
from jax.experimental import pallas as pl
from jax.experimental.pallas import tpu as pltpu


# ---------------------------------------------------------------------------
# Kernels
# ---------------------------------------------------------------------------

def _se_fused_kernel(x_ref, w1_ref, b1_ref, w2_ref, b2_ref, o_ref):
    """Single-pass SE for one batch block.

    x_ref / o_ref : (Bb, C, HW)  NCHW with spatial flattened (HW on lanes,
                                 C on sublanes) -> no transposes anywhere.
    w1_ref : (Cr, C)  fc1 weight, PyTorch (out, in) layout, pre-scaled by 1/HW.
    b1_ref : (Cr, 1)
    w2_ref : (C, Cr)  fc2 weight, PyTorch layout.
    b2_ref : (C, 1)
    """
    bb = x_ref.shape[0]
    w1 = w1_ref[...]
    b1 = b1_ref[...]
    w2 = w2_ref[...]
    b2 = b2_ref[...]
    # Static unroll over the small batch block; every step is plain 2-D,
    # column-oriented work, so no lane<->sublane relayouts are generated.
    for b in range(bb):
        x = x_ref[b]                                                 # (C, HW)
        # squeeze: cross-lane reduction, f32 accumulate (1/HW folded into w1).
        y = jnp.sum(x.astype(jnp.float32), axis=-1, keepdims=True)   # (C, 1)
        # excitation: tiny MXU matmuls (<<1% of runtime, kernel is HBM-bound).
        h = jnp.dot(w1, y, preferred_element_type=jnp.float32) + b1  # (Cr, 1)
        h = jnp.maximum(h, 0.0)
        s = jnp.dot(w2, h, preferred_element_type=jnp.float32) + b2  # (C, 1)
        s = jax.nn.sigmoid(s)
        # scale: per-channel gate broadcast along the HW lanes, native dtype.
        o_ref[b] = x * s.astype(x.dtype)


def _make_gate_kernel(hw_total):
    """Pass 1 of the two-pass path: HW-tiled reduce + excitation MLP -> gate."""

    def gate_kernel(x_ref, w1_ref, b1_ref, w2_ref, b2_ref, g_ref, acc_ref):
        t = pl.program_id(1)
        thw = x_ref.shape[-1]

        @pl.when(t == 0)
        def _():
            acc_ref[...] = jnp.zeros_like(acc_ref)

        x = x_ref[0].astype(jnp.float32)                        # (C, thw)
        if hw_total % thw != 0:
            # Mask the out-of-range lanes of the (padded) tail tile.
            lane = lax.broadcasted_iota(jnp.int32, x.shape, 1)
            x = jnp.where(t * thw + lane < hw_total, x, 0.0)
        acc_ref[...] += jnp.sum(x, axis=-1, keepdims=True)      # (C, 1)

        @pl.when(t == pl.num_programs(1) - 1)
        def _():
            y = acc_ref[...]                                     # (C, 1)
            h = jnp.dot(w1_ref[...], y,
                        preferred_element_type=jnp.float32) + b1_ref[...]
            h = jnp.maximum(h, 0.0)                              # (Cr, 1)
            s = jnp.dot(w2_ref[...], h,
                        preferred_element_type=jnp.float32) + b2_ref[...]
            g_ref[...] = jax.nn.sigmoid(s)[None]                 # (1, C, 1)

    return gate_kernel


def _se_scale_kernel(x_ref, g_ref, o_ref):
    """Pass 2 of the two-pass path: out = x * gate (fully parallel)."""
    x = x_ref[...]                                   # (1, C, thw)
    o_ref[...] = x * g_ref[...].astype(x.dtype)      # (1, C, 1) lane broadcast


# ---------------------------------------------------------------------------
# Tiling / budgeting helpers (all static Python)
# ---------------------------------------------------------------------------

def _vmem_budget_bytes():
    """Generation-aware scoped-VMEM budget (v7x only has 64 MiB per TC)."""
    try:
        cap = int(pltpu.get_tpu_info().vmem_capacity_bytes)
    except Exception:
        cap = 64 << 20  # conservative: v7x per-TensorCore VMEM
    return min(cap * 3 // 4, 96 << 20)


def _fused_vmem_bytes(bb, C, HW, itemsize, weight_bytes):
    blk = bb * C * HW * itemsize
    # 2x double-buffered input + 2x output + f32 squeeze temp + weights + slack.
    return 4 * blk + bb * C * HW * 4 + weight_bytes + (2 << 20)


def _pick_batch_block(B, C, HW, itemsize, weight_bytes, vmem_budget):
    """Largest divisor of B giving ~<=4 MiB blocks, >= min(4, B) grid steps."""
    target_block = 4 << 20
    min_grid = min(4, B)
    best = 1
    for bb in range(2, B + 1):
        if B % bb:
            continue
        if bb * C * HW * itemsize > target_block:
            break
        if _fused_vmem_bytes(bb, C, HW, itemsize, weight_bytes) > vmem_budget:
            break
        if (B // bb) < min_grid:
            break
        best = bb
    return best


def _pick_hw_tile(HW, C, itemsize, weight_bytes, vmem_budget):
    """HW tile (multiple of 128, or the full HW) targeting ~2 MiB blocks."""
    target = 2 << 20
    thw = max(128, (target // max(1, C * itemsize)) // 128 * 128)
    while thw > 128 and (4 * C * thw * itemsize + C * thw * 4 +
                         weight_bytes + (2 << 20)) > vmem_budget:
        thw -= 128
    if thw >= HW:
        thw = HW
    return int(thw)


# ---------------------------------------------------------------------------
# pallas_call wrappers
# ---------------------------------------------------------------------------

def _se_fused_call(x3, w1s, b1c, w2, b2c, vmem_budget):
    B, C, HW = x3.shape
    Cr = w1s.shape[0]
    itemsize = x3.dtype.itemsize
    weight_bytes = 2 * 4 * (Cr * C + Cr + C * Cr + C)   # double-buffered, f32
    bb = _pick_batch_block(B, C, HW, itemsize, weight_bytes, vmem_budget)
    vmem_limit = max(8 << 20,
                     min(vmem_budget,
                         _fused_vmem_bytes(bb, C, HW, itemsize, weight_bytes)))
    cost = pl.CostEstimate(
        flops=3 * B * HW * C + 4 * B * C * Cr,
        transcendentals=B * C,
        bytes_accessed=2 * B * HW * C * itemsize,
    )
    return pl.pallas_call(
        _se_fused_kernel,
        out_shape=jax.ShapeDtypeStruct((B, C, HW), x3.dtype),
        grid=(B // bb,),
        in_specs=[
            pl.BlockSpec((bb, C, HW), lambda i: (i, 0, 0)),
            pl.BlockSpec((Cr, C), lambda i: (0, 0)),
            pl.BlockSpec((Cr, 1), lambda i: (0, 0)),
            pl.BlockSpec((C, Cr), lambda i: (0, 0)),
            pl.BlockSpec((C, 1), lambda i: (0, 0)),
        ],
        out_specs=pl.BlockSpec((bb, C, HW), lambda i: (i, 0, 0)),
        compiler_params=pltpu.CompilerParams(
            dimension_semantics=("parallel",),
            vmem_limit_bytes=int(vmem_limit),
        ),
        cost_estimate=cost,
    )(x3, w1s, b1c, w2, b2c)


def _se_two_pass_call(x3, w1s, b1c, w2, b2c, vmem_budget, hw_tile):
    B, C, HW = x3.shape
    Cr = w1s.shape[0]
    itemsize = x3.dtype.itemsize
    weight_bytes = 2 * 4 * (Cr * C + Cr + C * Cr + C)
    if hw_tile is None:
        hw_tile = _pick_hw_tile(HW, C, itemsize, weight_bytes, vmem_budget)
    thw = int(hw_tile)
    if thw >= HW:
        thw = HW
    n_t = pl.cdiv(HW, thw)
    block_bytes = C * thw * itemsize

    # Pass 1: gates = sigmoid(fc2(relu(fc1(mean(x))))), HW-tiled reduction.
    gate_cost = pl.CostEstimate(
        flops=2 * B * HW * C + 4 * B * C * Cr,
        transcendentals=B * C,
        bytes_accessed=B * HW * C * itemsize + B * C * 4,
    )
    gates = pl.pallas_call(
        _make_gate_kernel(HW),
        out_shape=jax.ShapeDtypeStruct((B, C, 1), jnp.float32),
        grid=(B, n_t),
        in_specs=[
            pl.BlockSpec((1, C, thw), lambda b, t: (b, 0, t)),
            pl.BlockSpec((Cr, C), lambda b, t: (0, 0)),
            pl.BlockSpec((Cr, 1), lambda b, t: (0, 0)),
            pl.BlockSpec((C, Cr), lambda b, t: (0, 0)),
            pl.BlockSpec((C, 1), lambda b, t: (0, 0)),
        ],
        out_specs=pl.BlockSpec((1, C, 1), lambda b, t: (b, 0, 0)),
        scratch_shapes=[pltpu.VMEM((C, 1), jnp.float32)],
        compiler_params=pltpu.CompilerParams(
            dimension_semantics=("parallel", "arbitrary"),
            vmem_limit_bytes=int(max(8 << 20,
                                     min(vmem_budget,
                                         2 * block_bytes + C * thw * 4 +
                                         weight_bytes + (2 << 20)))),
        ),
        cost_estimate=gate_cost,
    )(x3, w1s, b1c, w2, b2c)

    # Pass 2: out = x * gate, every (b, t) tile independent.
    scale_cost = pl.CostEstimate(
        flops=B * HW * C,
        transcendentals=0,
        bytes_accessed=2 * B * HW * C * itemsize,
    )
    return pl.pallas_call(
        _se_scale_kernel,
        out_shape=jax.ShapeDtypeStruct((B, C, HW), x3.dtype),
        grid=(B, n_t),
        in_specs=[
            pl.BlockSpec((1, C, thw), lambda b, t: (b, 0, t)),
            pl.BlockSpec((1, C, 1), lambda b, t: (b, 0, 0)),
        ],
        out_specs=pl.BlockSpec((1, C, thw), lambda b, t: (b, 0, t)),
        compiler_params=pltpu.CompilerParams(
            dimension_semantics=("parallel", "parallel"),
            vmem_limit_bytes=int(max(8 << 20,
                                     min(vmem_budget,
                                         4 * block_bytes + (2 << 20)))),
        ),
        cost_estimate=scale_cost,
    )(x3, gates)


# ---------------------------------------------------------------------------
# Public entry point (PyTorch layouts, no transposes)
# ---------------------------------------------------------------------------

@functools.partial(jax.jit, static_argnames=("two_pass", "hw_tile"))
def se_layer(x, w1, b1, w2, b2, two_pass=None, hw_tile=None):
    """SELayer forward.

    PyTorch layouts: x (B, C, H, W); w1 (C//r, C); b1 (C//r,);
                     w2 (C, C//r);   b2 (C,).
    two_pass / hw_tile are static knobs (None -> auto, chosen from the
    generation's VMEM budget).
    """
    B, C, H, W = x.shape
    Cr = w1.shape[0]
    HW = H * W

    # Free reshape of contiguous NCHW — no HBM transposes anywhere.
    x3 = x.reshape(B, C, HW)
    # Fold the mean's 1/HW into the fc1 weights (squeeze becomes a raw sum).
    w1s = (w1 * (1.0 / HW)).astype(jnp.float32)
    b1c = b1.astype(jnp.float32).reshape(Cr, 1)
    w2f = w2.astype(jnp.float32)
    b2c = b2.astype(jnp.float32).reshape(C, 1)

    vmem_budget = _vmem_budget_bytes()
    itemsize = x.dtype.itemsize
    weight_bytes = 2 * 4 * (Cr * C + Cr + C * Cr + C)
    fused_fits = _fused_vmem_bytes(1, C, HW, itemsize, weight_bytes) <= vmem_budget
    use_two_pass = (not fused_fits) if two_pass is None else bool(two_pass)

    if use_two_pass:
        out3 = _se_two_pass_call(x3, w1s, b1c, w2f, b2c, vmem_budget, hw_tile)
    else:
        out3 = _se_fused_call(x3, w1s, b1c, w2f, b2c, vmem_budget)
    return out3.reshape(B, C, H, W)


def se_layer_ref(x, w1, b1, w2, b2):
    """Pure-JAX reference matching the PyTorch forward (weights in (out,in))."""
    xf = x.astype(jnp.float32)
    y = jnp.mean(xf, axis=(2, 3))                      # (B, C)
    h = jnp.maximum(y @ w1.T + b1, 0.0)                # (B, Cr)
    s = jax.nn.sigmoid(h @ w2.T + b2)                  # (B, C)
    return (xf * s[:, :, None, None]).astype(x.dtype)


if __name__ == "__main__":
    # SELayer(channel=32, reduction=8) at small shapes.
    B, C, H, W = 2, 32, 16, 16
    reduction = 8
    Cr = C // reduction

    key = jax.random.PRNGKey(0)
    kx, k1, k2, k3, k4 = jax.random.split(key, 5)

    x = jax.random.normal(kx, (B, C, H, W), dtype=jnp.float32)

    # Linear-style init (uniform +-1/sqrt(fan_in)), PyTorch (out, in) layout.
    lim1 = 1.0 / jnp.sqrt(jnp.float32(C))
    lim2 = 1.0 / jnp.sqrt(jnp.float32(Cr))
    w1 = jax.random.uniform(k1, (Cr, C), jnp.float32, -lim1, lim1)
    b1 = jax.random.uniform(k2, (Cr,), jnp.float32, -lim1, lim1)
    w2 = jax.random.uniform(k3, (C, Cr), jnp.float32, -lim2, lim2)
    b2 = jax.random.uniform(k4, (C,), jnp.float32, -lim2, lim2)

    ref = se_layer_ref(x, w1, b1, w2, b2)

    # 1) Default (fused, batch-blocked) path.
    out = jax.block_until_ready(se_layer(x, w1, b1, w2, b2))
    assert out.shape == (B, C, H, W)
    assert jnp.allclose(out, ref, atol=1e-5, rtol=1e-5), "fused path mismatch"

    # 2) Forced two-pass (reduce-then-scale) path, HW divisible by the tile.
    out2 = jax.block_until_ready(
        se_layer(x, w1, b1, w2, b2, two_pass=True, hw_tile=128))
    assert jnp.allclose(out2, ref, atol=1e-5, rtol=1e-5), "two-pass mismatch"

    # 3) Two-pass with HW not divisible by the tile (exercises the masked tail).
    x_odd = jax.random.normal(kx, (B, C, 12, 12), dtype=jnp.float32)
    ref_odd = se_layer_ref(x_odd, w1, b1, w2, b2)
    out3 = jax.block_until_ready(
        se_layer(x_odd, w1, b1, w2, b2, two_pass=True, hw_tile=128))
    assert jnp.allclose(out3, ref_odd, atol=1e-5, rtol=1e-5), "masked tail mismatch"

    print("KERNEL_OK")
</pallas_src>

<mosaic_0001>
module attributes {stable_mosaic.version = 11 : i64} {
  func.func @_se_fused_kernel(%arg0: i32, %arg1: memref<1x32x256xf32, #tpu.memory_space<vmem>>, %arg2: memref<4x32xf32, #tpu.memory_space<vmem>>, %arg3: memref<4x1xf32, #tpu.memory_space<vmem>>, %arg4: memref<32x4xf32, #tpu.memory_space<vmem>>, %arg5: memref<32x1xf32, #tpu.memory_space<vmem>>, %arg6: memref<1x32x256xf32, #tpu.memory_space<vmem>>) attributes {dimension_semantics = [#tpu.dimension_semantics<parallel>], iteration_bounds = array<i64: 2>, scalar_prefetch = 0 : i64, scratch_operands = 0 : i64, tpu.core_type = #tpu.core_type<tc>, window_params = [{transform_indices = @transform_0, window_bounds = array<i64: 1, 32, 256>}, {pipeline_mode = #tpu.pipeline_mode<synchronous>, transform_indices = @transform_1, window_bounds = array<i64: 4, 32>}, {pipeline_mode = #tpu.pipeline_mode<synchronous>, transform_indices = @transform_2, window_bounds = array<i64: 4, 1>}, {pipeline_mode = #tpu.pipeline_mode<synchronous>, transform_indices = @transform_3, window_bounds = array<i64: 32, 4>}, {pipeline_mode = #tpu.pipeline_mode<synchronous>, transform_indices = @transform_4, window_bounds = array<i64: 32, 1>}, {transform_indices = @transform_5, window_bounds = array<i64: 1, 32, 256>}]} {
    %c0 = arith.constant 0 : index
    %c0_0 = arith.constant 0 : index
    %0 = vector.load %arg2[%c0, %c0_0] : memref<4x32xf32, #tpu.memory_space<vmem>>, vector<4x32xf32>
    %c0_1 = arith.constant 0 : index
    %c0_2 = arith.constant 0 : index
    %1 = vector.load %arg3[%c0_1, %c0_2] : memref<4x1xf32, #tpu.memory_space<vmem>>, vector<4x1xf32>
    %c0_3 = arith.constant 0 : index
    %c0_4 = arith.constant 0 : index
    %2 = vector.load %arg4[%c0_3, %c0_4] : memref<32x4xf32, #tpu.memory_space<vmem>>, vector<32x4xf32>
    %c0_5 = arith.constant 0 : index
    %c0_6 = arith.constant 0 : index
    %3 = vector.load %arg5[%c0_5, %c0_6] : memref<32x1xf32, #tpu.memory_space<vmem>>, vector<32x1xf32>
    %c0_7 = arith.constant 0 : index
    %c0_8 = arith.constant 0 : index
    %c0_9 = arith.constant 0 : index
    %4 = vector.load %arg1[%c0_7, %c0_8, %c0_9] : memref<1x32x256xf32, #tpu.memory_space<vmem>>, vector<1x32x256xf32>
    %5 = vector.shape_cast %4 : vector<1x32x256xf32> to vector<32x256xf32>
    %cst = arith.constant dense<0.000000e+00> : vector<32xf32>
    %6 = vector.multi_reduction <add>, %5, %cst [1] : vector<32x256xf32> to vector<32xf32>
    %7 = vector.shape_cast %6 : vector<32xf32> to vector<32x1xf32>
    %cst_10 = arith.constant dense<0.000000e+00> : vector<4x1xf32>
    %8 = tpu.matmul %0, %7, %cst_10 {dimension_numbers = #tpu.dot_dimension_numbers<[1], [0], [0], [1], [0, 0, 1, 1], [], []>} : vector<4x32xf32>, vector<32x1xf32>, vector<4x1xf32> -> vector<4x1xf32>
    %9 = arith.addf %8, %1 : vector<4x1xf32>
    %cst_11 = arith.constant 0.000000e+00 : f32
    %10 = vector.broadcast %cst_11 : f32 to vector<4x1xf32>
    %11 = arith.maximumf %9, %10 : vector<4x1xf32>
    %cst_12 = arith.constant dense<0.000000e+00> : vector<32x1xf32>
    %12 = tpu.matmul %2, %11, %cst_12 {dimension_numbers = #tpu.dot_dimension_numbers<[1], [0], [0], [1], [0, 0, 1, 1], [], []>} : vector<32x4xf32>, vector<4x1xf32>, vector<32x1xf32> -> vector<32x1xf32>
    %13 = arith.addf %12, %3 : vector<32x1xf32>
    %14 = arith.negf %13 : vector<32x1xf32>
    %15 = math.exp %14 : vector<32x1xf32>
    %cst_13 = arith.constant 1.000000e+00 : f32
    %16 = vector.broadcast %cst_13 : f32 to vector<32x1xf32>
    %17 = arith.addf %16, %15 : vector<32x1xf32>
    %18 = arith.divf %16, %17 : vector<32x1xf32>
    %19 = vector.broadcast %18 : vector<32x1xf32> to vector<32x256xf32>
    %20 = arith.mulf %5, %19 : vector<32x256xf32>
    %c0_14 = arith.constant 0 : index
    %c0_15 = arith.constant 0 : index
    %c0_16 = arith.constant 0 : index
    %21 = vector.load %arg6[%c0_14, %c0_15, %c0_16] : memref<1x32x256xf32, #tpu.memory_space<vmem>>, vector<1x32x256xf32>
    %22 = vector.shape_cast %21 : vector<1x32x256xf32> to vector<32x256xf32>
    %23 = vector.shape_cast %20 : vector<32x256xf32> to vector<1x32x256xf32>
    tpu.vector_store %arg6[%c0_14, %c0_15, %c0_16], %23 {strides = array<i32>} : memref<1x32x256xf32, #tpu.memory_space<vmem>>, vector<1x32x256xf32>,
    return
  }
  func.func @transform_0(%arg0: i32) -> (i32, i32, i32) {
    %c0_i32 = arith.constant 0 : i32
    %c0_i32_0 = arith.constant 0 : i32
    %c0_i32_1 = arith.constant 0 : i32
    return %arg0, %c0_i32, %c0_i32_0 : i32, i32, i32
  }
  func.func @transform_1(%arg0: i32) -> (i32, i32) {
    %c0_i32 = arith.constant 0 : i32
    %c0_i32_0 = arith.constant 0 : i32
    %c0_i32_1 = arith.constant 0 : i32
    return %c0_i32, %c0_i32_0 : i32, i32
  }
  func.func @transform_2(%arg0: i32) -> (i32, i32) {
    %c0_i32 = arith.constant 0 : i32
    %c0_i32_0 = arith.constant 0 : i32
    %c0_i32_1 = arith.constant 0 : i32
    return %c0_i32, %c0_i32_0 : i32, i32
  }
  func.func @transform_3(%arg0: i32) -> (i32, i32) {
    %c0_i32 = arith.constant 0 : i32
    %c0_i32_0 = arith.constant 0 : i32
    %c0_i32_1 = arith.constant 0 : i32
    return %c0_i32, %c0_i32_0 : i32, i32
  }
  func.func @transform_4(%arg0: i32) -> (i32, i32) {
    %c0_i32 = arith.constant 0 : i32
    %c0_i32_0 = arith.constant 0 : i32
    %c0_i32_1 = arith.constant 0 : i32
    return %c0_i32, %c0_i32_0 : i32, i32
  }
  func.func @transform_5(%arg0: i32) -> (i32, i32, i32) {
    %c0_i32 = arith.constant 0 : i32
    %c0_i32_0 = arith.constant 0 : i32
    %c0_i32_1 = arith.constant 0 : i32
    return %arg0, %c0_i32, %c0_i32_0 : i32, i32, i32
  }
}

</mosaic_0001>

<llo_original>
// kernel: se_layer.1
$region0: #{se_layer.1}
  #allocation0 [shape = 'u32[]', space=smem, size = 0x4, offset = 0x4, fixed_abs, tag = 'smem constant byte address 0x4 - core index']
  #allocation1 [shape = 'u32[72,128]{1,0:T(1,128)}', space=vmem, size = 0x9000, scoped, tag = 'internal scratch']
  %s0 = inlined_call_operand.vmem [shape: f32[2,32,256], index: 0, kind: input, shape index: {}]
  %s1 = inlined_call_operand.vmem [shape: f32[4,32], index: 1, kind: input, shape index: {}]
  %s2 = inlined_call_operand.vmem [shape: f32[4,1], index: 2, kind: input, shape index: {}]
  %s3 = inlined_call_operand.vmem [shape: f32[32,4], index: 3, kind: input, shape index: {}]
  %s4 = inlined_call_operand.vmem [shape: f32[32,1], index: 4, kind: input, shape index: {}]
  %s5 = inlined_call_operand.vmem [shape: f32[2,32,256], index: 5, kind: output, shape index: {}]
  %s6 = sld [smem:[#allocation0]]
  $region53: #{se_layer.1} parent=0
    _
  %s8 = ssub.s32 1, %s6
  %s9 = scalar_select 0, %s8, %s6
  loop: start=0, step=1, limit=4
  $region2: #{se_layer.1} parent=0 // loop_pre_header
    _
  $region3: #{se_layer.1} parent=0 // loop_header
    %s11 = sphi 0, %s15
    %p12 = scmp.ge.s32.totalorder %s11, 4
    %s21 = sphi 0, %s23
    %s24 = sphi 0, %s21
    %s25 = sphi 0, %s24
    %s41 = sphi 0, %s25
    %s45 = sphi 0, %s45
    %s47 = sphi 0, %s45
    %s48 = sphi 0, %s47
    %s62 = sphi 0, %s48
    %s66 = sphi 0, %s66
    %s68 = sphi 0, %s66
    %s69 = sphi 0, %s68
    %s83 = sphi 0, %s69
    %s87 = sphi 0, %s87
    %s89 = sphi 0, %s87
    %s90 = sphi 0, %s89
    %s104 = sphi 0, %s90
    %s108 = sphi 0, %s108
    %s110 = sphi 0, %s108
    %s111 = sphi 0, %s110
    %s125 = sphi 0, %s111
    %s131 = sphi 0, %s133
    %s134 = sphi 0, %s131
    %s135 = sphi 0, %s134
    %s151 = sphi 0, %s135
  $region4: #{se_layer.1} parent=0 // loop_header_branch
    %14 = sbr.rel (%p12) target = $region8
  $region5: #{se_layer.1} parent=0 // loop_body
    %s16 = ssub.s32 %s11, 1
    %s17 = ssub.s32 %s11, 2
    %s18 = sadd.s32 %s11, 1
    %s19 = ssub.s32 %s11, %s18
    %p20 = scmp.eq.s32.totalorder %s19, 0
    %s22 = sadd.s32 %s21, 1
    %s23 = scalar_select %p20, %s21, %s22
    %p26 = pneg %p20
    %p27 = scmp.eq.s32.totalorder %s11, 1
    %p28 = por %p26, %p27
    %p29 = scmp.ne.s32.totalorder %s21, %s24
    %p30 = scmp.eq.s32.totalorder %s11, 0
    %p31 = por %p29, %p30
    %p32 = scmp.ne.s32.totalorder %s21, %s24
    %p33 = scmp.eq.s32.totalorder %s16, 1
    %p34 = por %p32, %p33
    %p35 = scmp.ne.s32.totalorder %s24, %s25
    %p36 = scmp.eq.s32.totalorder %s16, 0
    %p37 = por %p35, %p36
    %p38 = scmp.ne.s32.totalorder %s24, %s25
    %p39 = scmp.eq.s32.totalorder %s17, 1
    %p40 = por %p38, %p39
    %p42 = scmp.ne.s32.totalorder %s25, %s41
    %p43 = scmp.eq.s32.totalorder %s17, 0
    %p44 = por %p42, %p43
    %s46 = sadd.s32 %s45, 1
    %p49 = scmp.eq.s32.totalorder %s11, 1
    %p50 = scmp.ne.s32.totalorder %s45, %s47
    %p51 = scmp.eq.s32.totalorder %s11, 0
    %p52 = por %p50, %p51
    %p53 = scmp.ne.s32.totalorder %s45, %s47
    %p54 = scmp.eq.s32.totalorder %s16, 1
    %p55 = por %p53, %p54
    %p56 = scmp.ne.s32.totalorder %s47, %s48
    %p57 = scmp.eq.s32.totalorder %s16, 0
    %p58 = por %p56, %p57
    %p59 = scmp.ne.s32.totalorder %s47, %s48
    %p60 = scmp.eq.s32.totalorder %s17, 1
    %p61 = por %p59, %p60
    %p63 = scmp.ne.s32.totalorder %s48, %s62
    %p64 = scmp.eq.s32.totalorder %s17, 0
    %p65 = por %p63, %p64
    %s67 = sadd.s32 %s66, 1
    %p70 = scmp.eq.s32.totalorder %s11, 1
    %p71 = scmp.ne.s32.totalorder %s66, %s68
    %p72 = scmp.eq.s32.totalorder %s11, 0
    %p73 = por %p71, %p72
    %p74 = scmp.ne.s32.totalorder %s66, %s68
    %p75 = scmp.eq.s32.totalorder %s16, 1
    %p76 = por %p74, %p75
    %p77 = scmp.ne.s32.totalorder %s68, %s69
    %p78 = scmp.eq.s32.totalorder %s16, 0
    %p79 = por %p77, %p78
    %p80 = scmp.ne.s32.totalorder %s68, %s69
    %p81 = scmp.eq.s32.totalorder %s17, 1
    %p82 = por %p80, %p81
    %p84 = scmp.ne.s32.totalorder %s69, %s83
    %p85 = scmp.eq.s32.totalorder %s17, 0
    %p86 = por %p84, %p85
    %s88 = sadd.s32 %s87, 1
    %p91 = scmp.eq.s32.totalorder %s11, 1
    %p92 = scmp.ne.s32.totalorder %s87, %s89
    %p93 = scmp.eq.s32.totalorder %s11, 0
    %p94 = por %p92, %p93
    %p95 = scmp.ne.s32.totalorder %s87, %s89
    %p96 = scmp.eq.s32.totalorder %s16, 1
    %p97 = por %p95, %p96
    %p98 = scmp.ne.s32.totalorder %s89, %s90
    %p99 = scmp.eq.s32.totalorder %s16, 0
    %p100 = por %p98, %p99
    %p101 = scmp.ne.s32.totalorder %s89, %s90
    %p102 = scmp.eq.s32.totalorder %s17, 1
    %p103 = por %p101, %p102
    %p105 = scmp.ne.s32.totalorder %s90, %s104
    %p106 = scmp.eq.s32.totalorder %s17, 0
    %p107 = por %p105, %p106
    %s109 = sadd.s32 %s108, 1
    %p112 = scmp.eq.s32.totalorder %s11, 1
    %p113 = scmp.ne.s32.totalorder %s108, %s110
    %p114 = scmp.eq.s32.totalorder %s11, 0
    %p115 = por %p113, %p114
    %p116 = scmp.ne.s32.totalorder %s108, %s110
    %p117 = scmp.eq.s32.totalorder %s16, 1
    %p118 = por %p116, %p117
    %p119 = scmp.ne.s32.totalorder %s110, %s111
    %p120 = scmp.eq.s32.totalorder %s16, 0
    %p121 = por %p119, %p120
    %p122 = scmp.ne.s32.totalorder %s110, %s111
    %p123 = scmp.eq.s32.totalorder %s17, 1
    %p124 = por %p122, %p123
    %p126 = scmp.ne.s32.totalorder %s111, %s125
    %p127 = scmp.eq.s32.totalorder %s17, 0
    %p128 = por %p126, %p127
    %s129 = ssub.s32 %s11, %s18
    %p130 = scmp.eq.s32.totalorder %s129, 0
    %s132 = sadd.s32 %s131, 1
    %s133 = scalar_select %p130, %s131, %s132
    %p136 = pneg %p130
    %p137 = scmp.eq.s32.totalorder %s11, 1
    %p138 = por %p136, %p137
    %p139 = scmp.ne.s32.totalorder %s131, %s134
    %p140 = scmp.eq.s32.totalorder %s11, 0
    %p141 = por %p139, %p140
    %p142 = scmp.ne.s32.totalorder %s131, %s134
    %p143 = scmp.eq.s32.totalorder %s16, 1
    %p144 = por %p142, %p143
    %p145 = scmp.ne.s32.totalorder %s134, %s135
    %p146 = scmp.eq.s32.totalorder %s16, 0
    %p147 = por %p145, %p146
    %p148 = scmp.ne.s32.totalorder %s134, %s135
    %p149 = scmp.eq.s32.totalorder %s17, 1
    %p150 = por %p148, %p149
    %p152 = scmp.ne.s32.totalorder %s135, %s151
    %p153 = scmp.eq.s32.totalorder %s17, 0
    %p154 = por %p152, %p153
    %p155 = scmp.le.s32.totalorder 1, %s11
    %p156 = scmp.lt.s32.totalorder %s11, 3
    %p157 = pnand %p155, %p156
    %p158 = pneg %p157
    // Predicated region
    $region9: #{se_layer.1} parent=5 // pred_check
      _
    $region10: #{se_layer.1} parent=5 // pred_check_branch
      %160 = sbr.rel (%p157) target = $region12
    $region11: #{se_layer.1} parent=5 // pred_region
      %s161 = ssub.s32 %s11, 1
      // Predicated region
      $region13: #{se_layer.1} parent=11 // pred_check
        %p162 = pneg %p58
      $region14: #{se_layer.1} parent=11 // pred_check_branch
        %164 = sbr.rel (%p162) target = $region16
      $region15: #{se_layer.1} parent=11 // pred_region
        _
      $region16: #{se_layer.1} parent=11 // pred_fallthru
        _
      // Predicated region
      $region17: #{se_layer.1} parent=11 // pred_check
        %p165 = pneg %p79
      $region18: #{se_layer.1} parent=11 // pred_check_branch
        %167 = sbr.rel (%p165) target = $region20
      $region19: #{se_layer.1} parent=11 // pred_region
        _
      $region20: #{se_layer.1} parent=11 // pred_fallthru
        _
      // Predicated region
      $region21: #{se_layer.1} parent=11 // pred_check
        %p168 = pneg %p100
      $region22: #{se_layer.1} parent=11 // pred_check_branch
        %170 = sbr.rel (%p168) target = $region24
      $region23: #{se_layer.1} parent=11 // pred_region
        _
      $region24: #{se_layer.1} parent=11 // pred_fallthru
        _
      // Predicated region
      $region25: #{se_layer.1} parent=11 // pred_check
        %p171 = pneg %p121
      $region26: #{se_layer.1} parent=11 // pred_check_branch
        %173 = sbr.rel (%p171) target = $region28
      $region27: #{se_layer.1} parent=11 // pred_region
        _
      $region28: #{se_layer.1} parent=11 // pred_fallthru
        _
    $region12: #{se_layer.1} parent=5 // pred_fallthru
      _
    %p174 = scmp.lt.s32.totalorder %s11, 2
    // Predicated region
    $region29: #{se_layer.1} parent=5 // pred_check
      %p175 = pneg %p174
    $region30: #{se_layer.1} parent=5 // pred_check_branch
      %177 = sbr.rel (%p175) target = $region32
    $region31: #{se_layer.1} parent=5 // pred_region
      // Predicated region
      $region33: #{se_layer.1} parent=31 // pred_check
        %p178 = pneg %p31
      $region34: #{se_layer.1} parent=31 // pred_check_branch
        %180 = sbr.rel (%p178) target = $region36
      $region35: #{se_layer.1} parent=31 // pred_region
        %p181 = scmp.lt.s32.totalorder %s11, 1
        %s182 = scalar_select %p181, %s11, 1
        %s183 = smul.addr %s182, 8
        %s184 = smul.addr %s183, 8
        %s185 = scalar_lea.vmem %s0, %s184
      $region36: #{se_layer.1} parent=31 // pred_fallthru
        _
    $region32: #{se_layer.1} parent=5 // pred_fallthru
      _
    %p186 = scmp.le.s32.totalorder 1, %s11
    %p187 = scmp.lt.s32.totalorder %s11, 3
    %p188 = pnand %p186, %p187
    %p189 = pneg %p188
    // Predicated region
    $region37: #{se_layer.1} parent=5 // pred_check
      _
    $region38: #{se_layer.1} parent=5 // pred_check_branch
      %191 = sbr.rel (%p188) target = $region40
    $region39: #{se_layer.1} parent=5 // pred_region
      %s192 = ssub.s32 %s11, 1
      %p193 = scmp.lt.s32.totalorder %s16, 1
      %s194 = scalar_select %p193, %s16, 1
      %s195 = smul.addr %s194, 8
      %s196 = smul.addr %s195, 8
      %s197 = scalar_lea.vmem %s0, %s196
      %p198 = pneg %p37
      %p199 = pneg %p34
      %p200 = pneg %p58
      %p201 = pneg %p55
      %p202 = pneg %p79
      %p203 = pneg %p76
      %p204 = pneg %p100
      %p205 = pneg %p97
      %p206 = pneg %p121
      %p207 = pneg %p118
      %p208 = pneg %p147
      %p209 = pneg %p144
      %p210 = scmp.lt.s32.totalorder %s16, 1
      %s211 = scalar_select %p210, %s16, 1
      %s212 = smul.addr %s211, 8
      %s213 = smul.addr %s212, 8
      %s214 = scalar_lea.vmem %s5, %s213
      %p215 = scmp.lt.s32.totalorder %s16, 1
      %s216 = scalar_select %p215, %s16, 1
      %s217 = smul.addr %s216, 8
      %s218 = smul.addr %s217, 8
      %s219 = scalar_lea.vmem %s0, %s218
      %p220 = scmp.lt.s32.totalorder %s16, 1
      %s221 = scalar_select %p220, %s16, 1
      %s222 = smul.addr %s221, 8
      %s223 = smul.addr %s222, 8
      %s224 = scalar_lea.vmem %s5, %s223
      %v225 = vld [vmem:[%s1] sm:$0xf]
      %v226 = vld [vmem:[%s2] sm:$0xf]
      %v227 = vld [vmem:[%s3] sm:$0xff]
      %v228 = vld [vmem:[%s3 + $0x8] sm:$0xff]
      %v229 = vld [vmem:[%s3 + $0x10] sm:$0xff]
      %v230 = vld [vmem:[%s3 + $0x18] sm:$0xff]
      %v231 = vld [vmem:[%s4] sm:$0xff]
      %v232 = vld [vmem:[%s4 + $0x8] sm:$0xff]
      %v233 = vld [vmem:[%s4 + $0x10] sm:$0xff]
      %v234 = vld [vmem:[%s4 + $0x18] sm:$0xff]
      %v235 = vld [vmem:[%s219] sm:$0xff]
      %v236 = vld [vmem:[%s219 + $0x8] sm:$0xff]
      %v237 = vld [vmem:[%s219 + $0x10] sm:$0xff]
      %v238 = vld [vmem:[%s219 + $0x18] sm:$0xff]
      %v239 = vld [vmem:[%s219 + $0x20] sm:$0xff]
      %v240 = vld [vmem:[%s219 + $0x28] sm:$0xff]
      %v241 = vld [vmem:[%s219 + $0x30] sm:$0xff]
      %v242 = vld [vmem:[%s219 + $0x38] sm:$0xff]
      %v243 = vadd.f32 %v235, %v236
      %244 = vadd.xlane.f32.xlu0 %v243
      %v245 = vpop.xlane.xlu0 %244
      %v246 = vadd.f32 %v237, %v238
      %247 = vadd.xlane.f32.xlu0 %v246
      %v248 = vpop.xlane.xlu0 %247
      %v249 = vadd.f32 %v239, %v240
      %250 = vadd.xlane.f32.xlu0 %v249
      %v251 = vpop.xlane.xlu0 %250
      %v252 = vadd.f32 %v241, %v242
      %253 = vadd.xlane.f32.xlu0 %v252
      %v254 = vpop.xlane.xlu0 %253
      %vm255 = vcmask 261120
      %v257 = vsel %vm255, %v225, 0
      %259 = vmatpush.msra.mxu0 0.0
      %260 = vmatpush.msra.mxu0 0.0
      %261 = vmatpush.msra.mxu0 0.0
      %262 = vmatpush.msra.mxu0 0.0
      %263 = vmatpush.msra.mxu0 0.0
      %264 = vmatpush.msra.mxu0 0.0
      %265 = vmatpush.msra.mxu0 0.0
      %266 = vmatpush.msra.mxu0 0.0
      %267 = vmatpush.msra.mxu0 0.0
      %268 = vmatpush.msra.mxu0 0.0
      %269 = vmatpush.msra.mxu0 0.0
      %270 = vmatpush.msra.mxu0 0.0
      %271 = vmatpush.msra.mxu0 %v254
      %272 = vmatpush.msra.mxu0 %v251
      %273 = vmatpush.msra.mxu0 %v248
      %274 = vmatpush.msra.mxu0 %v245
      %275 = vmatmul.f32.gmra.mxu0 %v257
      %v276 = vpop.f32.mrf.mxu0
      %v277 = vadd.f32 %v226, %v276
      %278 = vdwg.mxu0
      %v279 = vmax.f32 %v277, 0.0
      %vm280 = vcmask 31744
      %v282 = vsel %vm280, %v227, 0
      %v285 = vsel %vm280, %v228, 0
      %v288 = vsel %vm280, %v229, 0
      %v291 = vsel %vm280, %v230, 0
      %vm293 = vcmask 1043456
      %v295 = vsel %vm293, %v279, 0
      %297 = vmatpush.msra.mxu0 0.0
      %298 = vmatpush.msra.mxu0 0.0
      %299 = vmatpush.msra.mxu0 0.0
      %300 = vmatpush.msra.mxu0 0.0
      %301 = vmatpush.msra.mxu0 0.0
      %302 = vmatpush.msra.mxu0 0.0
      %303 = vmatpush.msra.mxu0 0.0
      %304 = vmatpush.msra.mxu0 0.0
      %305 = vmatpush.msra.mxu0 0.0
      %306 = vmatpush.msra.mxu0 0.0
      %307 = vmatpush.msra.mxu0 0.0
      %308 = vmatpush.msra.mxu0 0.0
      %309 = vmatpush.msra.mxu0 0.0
      %310 = vmatpush.msra.mxu0 0.0
      %311 = vmatpush.msra.mxu0 0.0
      %312 = vmatpush.msra.mxu0 %v295
      %313 = vmatmul.f32.gmra.mxu0 %v282
      %v314 = vpop.f32.mrf.mxu0
      %v315 = vadd.f32 %v231, %v314
      %316 = vmatmul.f32.gmra.mxu0 %v285
      %v317 = vpop.f32.mrf.mxu0
      %v318 = vadd.f32 %v232, %v317
      %319 = vmatmul.f32.gmra.mxu0 %v288
      %v320 = vpop.f32.mrf.mxu0
      %v321 = vadd.f32 %v233, %v320
      %322 = vmatmul.f32.gmra.mxu0 %v291
      %v323 = vpop.f32.mrf.mxu0
      %v324 = vadd.f32 %v234, %v323
      %325 = vdwg.mxu0
      %v326 = vxor.u32 %v315, 2147483648
      %v327 = vxor.u32 %v318, 2147483648
      %v328 = vxor.u32 %v321, 2147483648
      %v329 = vxor.u32 %v324, 2147483648
      %v330 = vmul.f32 %v326, 1.442695
      %v331 = vpow.pop %v330
      %v332 = vmul.f32 %v327, 1.442695
      %v333 = vpow.pop %v332
      %v334 = vmul.f32 %v328, 1.442695
      %v335 = vpow.pop %v334
      %v336 = vmul.f32 %v329, 1.442695
      %v337 = vpow.pop %v336
      %v338 = vadd.f32 %v331, 1.0
      %v339 = vadd.f32 %v333, 1.0
      %v340 = vadd.f32 %v335, 1.0
      %v341 = vadd.f32 %v337, 1.0
      %v342 = vrcp.pop %v338
      %v343 = vmul.f32 %v338, %v342
      %v344 = vsub.f32 1.0, %v343
      %v345 = vmul.f32 %v342, %v344
      %v346 = vadd.f32 %v342, %v345
      %vm347 = vweird.f32 %v338
      %vm348 = vweird.f32 %v342
      %vm349 = vmor %vm347, %vm348
      %v350 = vsel %vm349, %v342, %v346
      %v351 = vand.u32 2147483647, %v338
      %vm352 = vcmp.eq.f32.partialorder %v351, 8.507059e+37
      %v353 = vand.u32 %v338, 2147483648
      %v354 = vor.u32 1.1754944e-38, %v353
      %v355 = vsel %vm352, %v354, %v350
      %v356 = vmul.f32 1.0, %v355
      %v357 = vrcp.pop %v339
      %v358 = vmul.f32 %v339, %v357
      %v359 = vsub.f32 1.0, %v358
      %v360 = vmul.f32 %v357, %v359
      %v361 = vadd.f32 %v357, %v360
      %vm362 = vweird.f32 %v339
      %vm363 = vweird.f32 %v357
      %vm364 = vmor %vm362, %vm363
      %v365 = vsel %vm364, %v357, %v361
      %v366 = vand.u32 2147483647, %v339
      %vm367 = vcmp.eq.f32.partialorder %v366, 8.507059e+37
      %v368 = vand.u32 %v339, 2147483648
      %v369 = vor.u32 1.1754944e-38, %v368
      %v370 = vsel %vm367, %v369, %v365
      %v371 = vmul.f32 1.0, %v370
      %v372 = vrcp.pop %v340
      %v373 = vmul.f32 %v340, %v372
      %v374 = vsub.f32 1.0, %v373
      %v375 = vmul.f32 %v372, %v374
      %v376 = vadd.f32 %v372, %v375
      %vm377 = vweird.f32 %v340
      %vm378 = vweird.f32 %v372
      %vm379 = vmor %vm377, %vm378
      %v380 = vsel %vm379, %v372, %v376
      %v381 = vand.u32 2147483647, %v340
      %vm382 = vcmp.eq.f32.partialorder %v381, 8.507059e+37
      %v383 = vand.u32 %v340, 2147483648
      %v384 = vor.u32 1.1754944e-38, %v383
      %v385 = vsel %vm382, %v384, %v380
      %v386 = vmul.f32 1.0, %v385
      %v387 = vrcp.pop %v341
      %v388 = vmul.f32 %v341, %v387
      %v389 = vsub.f32 1.0, %v388
      %v390 = vmul.f32 %v387, %v389
      %v391 = vadd.f32 %v387, %v390
      %vm392 = vweird.f32 %v341
      %vm393 = vweird.f32 %v387
      %vm394 = vmor %vm392, %vm393
      %v395 = vsel %vm394, %v387, %v391
      %v396 = vand.u32 2147483647, %v341
      %vm397 = vcmp.eq.f32.partialorder %v396, 8.507059e+37
      %v398 = vand.u32 %v341, 2147483648
      %v399 = vor.u32 1.1754944e-38, %v398
      %v400 = vsel %vm397, %v399, %v395
      %v401 = vmul.f32 1.0, %v400
      %403 = vset.pattern.permute.xlu0 0
      %404 = vperm.xlu0 %403, %v356
      %v405 = vpop.permute.xlu0 %404
      %408 = vset.pattern.permute.xlu0 0
      %409 = vperm.xlu0 %408, %v371
      %v410 = vpop.permute.xlu0 %409
      %413 = vset.pattern.permute.xlu0 0
      %414 = vperm.xlu0 %413, %v386
      %v415 = vpop.permute.xlu0 %414
      %418 = vset.pattern.permute.xlu0 0
      %419 = vperm.xlu0 %418, %v401
      %v420 = vpop.permute.xlu0 %419
      %v422 = vmul.f32 %v235, %v405
      %v423 = vmul.f32 %v236, %v405
      %v424 = vmul.f32 %v237, %v410
      %v425 = vmul.f32 %v238, %v410
      %v426 = vmul.f32 %v239, %v415
      %v427 = vmul.f32 %v240, %v415
      %v428 = vmul.f32 %v241, %v420
      %v429 = vmul.f32 %v242, %v420
      %430 = vst [vmem:[%s224] sm:$0xff] %v422
      %431 = vst [vmem:[%s224 + $0x8] sm:$0xff] %v423
      %432 = vst [vmem:[%s224 + $0x10] sm:$0xff] %v424
      %433 = vst [vmem:[%s224 + $0x18] sm:$0xff] %v425
      %434 = vst [vmem:[%s224 + $0x20] sm:$0xff] %v426
      %435 = vst [vmem:[%s224 + $0x28] sm:$0xff] %v427
      %436 = vst [vmem:[%s224 + $0x30] sm:$0xff] %v428
      %437 = vst [vmem:[%s224 + $0x38] sm:$0xff] %v429
      %p438 = scmp.lt.s32.totalorder %s16, 1
      %s439 = scalar_select %p438, %s16, 1
      %s440 = smul.addr %s439, 8
      %s441 = smul.addr %s440, 8
      %s442 = scalar_lea.vmem %s5, %s441
      // Predicated region
      $region41: #{se_layer.1} parent=39 // pred_check
        %p443 = pneg %p144
      $region42: #{se_layer.1} parent=39 // pred_check_branch
        %445 = sbr.rel (%p443) target = $region44
      $region43: #{se_layer.1} parent=39 // pred_region
        _
      $region44: #{se_layer.1} parent=39 // pred_fallthru
        _
    $region40: #{se_layer.1} parent=5 // pred_fallthru
      _
    %p446 = scmp.le.s32.totalorder 2, %s11
    // Predicated region
    $region45: #{se_layer.1} parent=5 // pred_check
      %p447 = pneg %p446
    $region46: #{se_layer.1} parent=5 // pred_check_branch
      %449 = sbr.rel (%p447) target = $region48
    $region47: #{se_layer.1} parent=5 // pred_region
      %s450 = ssub.s32 %s11, 2
      // Predicated region
      $region49: #{se_layer.1} parent=47 // pred_check
        %p451 = pneg %p150
      $region50: #{se_layer.1} parent=47 // pred_check_branch
        %453 = sbr.rel (%p451) target = $region52
      $region51: #{se_layer.1} parent=47 // pred_region
        %p454 = scmp.lt.s32.totalorder %s17, 1
        %s455 = scalar_select %p454, %s17, 1
        %s456 = smul.addr %s455, 8
        %s457 = smul.addr %s456, 8
        %s458 = scalar_lea.vmem %s5, %s457
      $region52: #{se_layer.1} parent=47 // pred_fallthru
        _
    $region48: #{se_layer.1} parent=5 // pred_fallthru
      _
  $region6: #{se_layer.1} parent=0 // loop_footer
    %s15 = sadd.s32 1, %s11
  $region7: #{se_layer.1} parent=0 // loop_footer_branch
    %10 = sbr.rel target = $region3
  $region8: #{se_layer.1} parent=0 // loop_exit
    _

</llo_original>
